<compile_context>
chip_gen: v6e
topology: v6e:2x2x1
jax: 0.10.0
libtpu: 0.0.40
codegen_flags: <defaults>
</compile_context>

<pallas_src>
import jax
import jax.numpy as jnp
from jax.experimental import pallas as pl
from jax.experimental.pallas import tpu as pltpu


# ----------------------------------------------------------------------------
# Pallas kernel: identity pass-through ("guard" touch of the tensor).
# ----------------------------------------------------------------------------
def _guard_copy_kernel(x_ref, o_ref):
    # Whole-block copy through VMEM: the "guarded" observation of the tensor
    # on the compute path.  Pure vld/vst + DMA, no VPU/XLU work.
    o_ref[...] = x_ref[...]


_SMALL_BYTES = 256 * 1024              # below this: single block, no tiling
_TARGET_BLOCK_BYTES = 4 * 1024 * 1024  # ~4 MiB/block: double-buffers in+out
                                       # well inside v7x's 64 MiB VMEM, and is
                                       # large enough to sit near the HBM
                                       # roofline on v5e/v6e as well.


def _pick_cols(n: int):
    """Largest lane-dense column count (multiple of 128) that divides n."""
    for c in (4096, 2048, 1024, 512, 256, 128):
        if n % c == 0:
            return c
    return None


def _pallas_guard(x: jax.Array) -> jax.Array:
    """Identity copy of `x` routed through a Pallas TPU kernel (lane-dense, tiled)."""
    n = x.size
    if n == 0:
        return x  # nothing to guard

    itemsize = jnp.dtype(x.dtype).itemsize
    nbytes = n * itemsize
    cols = _pick_cols(n)
    flat = x.reshape(-1)

    if cols is None and nbytes > _SMALL_BYTES:
        # Ragged (not a multiple of 128 elements) AND large: a whole-array
        # block could exceed the scoped VMEM limit.  The guard is pure
        # ordering, so an optimization barrier is the exact-identity fallback.
        # TODO(synk): pad-to-128 tiled path for huge ragged tensors if needed.
        return jax.lax.optimization_barrier(x)

    # ---------------- small / ragged fast path: one full-array block ----------
    if cols is None or nbytes <= _SMALL_BYTES:
        rows = n // cols if cols is not None else 1
        cols = cols if cols is not None else n
        x2d = flat.reshape(rows, cols)
        out = pl.pallas_call(
            _guard_copy_kernel,
            out_shape=jax.ShapeDtypeStruct((rows, cols), x.dtype),
            in_specs=[pl.BlockSpec((rows, cols), lambda: (0, 0))],
            out_specs=pl.BlockSpec((rows, cols), lambda: (0, 0)),
            input_output_aliases={0: 0},
        )(x2d)
        return out.reshape(x.shape)

    # ---------------- tiled path: lane-dense (rows, cols), 1-D row-tile grid --
    rows = n // cols
    x2d = flat.reshape(rows, cols)

    # Sublane multiple per dtype: f32 -> 8, bf16 -> 16, int8/fp8/bool -> 32.
    sub = max(8, 32 // itemsize)
    tile_rows = max(sub, (_TARGET_BLOCK_BYTES // (cols * itemsize)) // sub * sub)
    tile_rows = min(tile_rows, rows)  # == rows (full dim) if the array is short

    grid = (pl.cdiv(rows, tile_rows),)
    block_bytes = tile_rows * cols * itemsize
    # 2 operands (in + out) x 2 pipeline buffers + headroom; keep under v7x's
    # 64 MiB per-TC VMEM.
    vmem_bytes = min(max(32 * 1024 * 1024, int(block_bytes * 4 * 1.5)),
                     56 * 1024 * 1024)

    out = pl.pallas_call(
        _guard_copy_kernel,
        out_shape=jax.ShapeDtypeStruct((rows, cols), x.dtype),
        grid=grid,
        in_specs=[pl.BlockSpec((tile_rows, cols), lambda i: (i, 0))],
        out_specs=pl.BlockSpec((tile_rows, cols), lambda i: (i, 0)),
        input_output_aliases={0: 0},
        compiler_params=pltpu.CompilerParams(
            dimension_semantics=("parallel",),   # shards across v7x's 2 TCs
            vmem_limit_bytes=vmem_bytes,
        ),
    )(x2d)
    return out.reshape(x.shape)


# ----------------------------------------------------------------------------
# Module re-implementation (JAX side).
# ----------------------------------------------------------------------------
class MemoryPlanContext:
    """Minimal stand-in: there are no CUDA streams/events on TPU."""
    MEMORY_STREAM = None
    COMPUTE_STREAM = None
    EVENTS = None
    INITIALIZED = False

    @classmethod
    def init(cls, event_num=1, memory_stream=None, compute_stream=None):
        # TODO(synk): CUDA streams / events have no TPU equivalent; ordering on
        # TPU is expressed via data dependence (the Pallas guard kernel above).
        cls.MEMORY_STREAM = memory_stream
        cls.COMPUTE_STREAM = compute_stream
        cls.EVENTS = [object() for _ in range(event_num)]
        cls.INITIALIZED = True

    @classmethod
    def set_memory_stream(cls, stream):
        cls.MEMORY_STREAM = stream

    @classmethod
    def set_compute_stream(cls, stream):
        cls.COMPUTE_STREAM = stream


class GroupedMemoryPlanner:
    """JAX/Pallas re-implementation of brt.runtime.memory_planner.GroupedMemoryPlanner."""

    def __init__(self, event_id: int, tensor_group=None):
        assert MemoryPlanContext.INITIALIZED, (
            "MemPlanContext is not initialized before creating a PreLoader instance"
        )
        self.event_id = event_id
        self.tensor_group = tensor_group

    def guard(self, event_id: int, inputs):
        # CUDA: EVENTS[event_id].wait(COMPUTE_STREAM).
        # TPU analogue: route every array leaf through the Pallas identity
        # kernel so downstream consumers carry a data dependence on the guard
        # point.  Values are unchanged (exact identity).
        del event_id  # the TPU guard is attached to the data, not an event id
        return jax.tree_util.tree_map(
            lambda leaf: _pallas_guard(leaf) if isinstance(leaf, jax.Array) else leaf,
            inputs,
        )

    # load / unload manage host<->device tensor-group movement via CUDA
    # streams; they have no self-contained Pallas equivalent here.
    # TODO(synk): tensor_group load/unload (memory stream) not implemented on TPU.


class GroupedPredictGuarder(GroupedMemoryPlanner):
    """JAX/Pallas re-implementation of brt.runtime.memory_planner.GroupedPredictGuarder."""

    def __init__(self, event_id: int):
        super().__init__(event_id)

    def forward(self, inputs):
        # guard(...) is an exact identity on the values; pass-through semantics
        # of the PyTorch forward are preserved.
        return self.guard(self.event_id, inputs)

    __call__ = forward


# ----------------------------------------------------------------------------
# Demo / self-test.
# ----------------------------------------------------------------------------
if __name__ == "__main__":
    MemoryPlanContext.init(event_num=2)

    key = jax.random.PRNGKey(0)
    k0, k1, k2 = jax.random.split(key, 3)

    # Two small NCHW tensors (exercise the single-block fast path).
    x0 = jax.random.normal(k0, (2, 4, 16, 16), dtype=jnp.float32)
    x1 = jax.random.normal(k1, (2, 4, 16, 16), dtype=jnp.float32)
    inputs = [x0, x1]

    guarder = GroupedPredictGuarder(event_id=0)

    outputs = guarder(inputs)
    outputs = jax.tree_util.tree_map(jax.block_until_ready, outputs)

    # Forward is an identity pass-through: verify exact equality.
    assert isinstance(outputs, list) and len(outputs) == len(inputs)
    for o, x in zip(outputs, inputs):
        assert o.shape == x.shape and o.dtype == x.dtype
        assert bool(jnp.array_equal(o, x))

    # Larger tensor (8 MiB) to exercise the tiled, lane-dense, multi-block path.
    big = jax.random.normal(k2, (2048, 1024), dtype=jnp.float32)
    big_out = jax.block_until_ready(guarder(big))
    assert big_out.shape == big.shape and big_out.dtype == big.dtype
    assert bool(jnp.array_equal(big_out, big))

    print("KERNEL_OK")
</pallas_src>

<mosaic_0001>
module attributes {stable_mosaic.version = 11 : i64} {
  func.func @_guard_copy_kernel(%arg0: memref<1x2048xf32, #tpu.memory_space<vmem>>, %arg1: memref<1x2048xf32, #tpu.memory_space<vmem>>) attributes {dimension_semantics = [], scalar_prefetch = 0 : i64, scratch_operands = 0 : i64, tpu.core_type = #tpu.core_type<tc>} {
    %c0 = arith.constant 0 : index
    %c0_0 = arith.constant 0 : index
    %0 = vector.load %arg0[%c0, %c0_0] : memref<1x2048xf32, #tpu.memory_space<vmem>>, vector<1x2048xf32>
    %c0_1 = arith.constant 0 : index
    %c0_2 = arith.constant 0 : index
    %1 = vector.load %arg1[%c0_1, %c0_2] : memref<1x2048xf32, #tpu.memory_space<vmem>>, vector<1x2048xf32>
    tpu.vector_store %arg1[%c0_1, %c0_2], %0 {strides = array<i32>} : memref<1x2048xf32, #tpu.memory_space<vmem>>, vector<1x2048xf32>,
    return
  }
}

</mosaic_0001>

<llo_original>
// kernel: tpu_custom_call.1
$region0: #{tpu_custom_call.1}
  #allocation0 [shape = 'u32[]', space=smem, size = 0x4, offset = 0x4, fixed_abs, tag = 'smem constant byte address 0x4 - core index']
  #allocation1 [shape = 'u32[144,128]{1,0:T(1,128)}', space=vmem, size = 0x12000, scoped, tag = 'internal scratch']
  %s0 = inlined_call_operand.hbm [shape: f32[1,2048], index: 0, kind: input, shape index: {}, may-alias: {0,1}]
  %s1 = inlined_call_operand.hbm [shape: f32[1,2048], index: 1, kind: output, shape index: {}, may-alias: {0,1}]
  %s2 = sld [smem:[#allocation0]]
  $region18: #{tpu_custom_call.1} parent=0
    _
  %s4 = ssub.s32 1, %s2
  %s5 = scalar_select 0, %s4, %s2
  $region1: #{tpu_custom_call.1} parent=0
    #allocation2 [shape = 'u8[8192]{0}', space=vmem, size = 0x2000, scoped, tag = 'input window, operand 0, single buffered']
    #allocation3 [shape = 's32[1]{0}', space=sflag, size = 0x4, scoped, tag = 'scoped memory for tpu_custom_call.1']
    #allocation4 [shape = 's32[1]{0}', space=sflag, size = 0x4, scoped, tag = 'scoped memory for tpu_custom_call.1']
    #allocation5 [shape = 'u8[8192]{0}', space=vmem, size = 0x2000, scoped, tag = 'output window, operand 0, single buffered']
    %6 = vsyncpa [#allocation3], 0
    %7 = vsyncpa [#allocation4], 0
    // Predicated region
    $region2: #{tpu_custom_call.1} parent=1 // pred_check
      _
    $region3: #{tpu_custom_call.1} parent=1 // pred_check_branch
      %9 = sbr.rel (0) target = $region5
    $region4: #{tpu_custom_call.1} parent=1 // pred_region
      %s11 = ssub.s32 256, 256
      %12 = vsyncadd [#allocation3], %s11
      %s14 = sshll.u32 [#allocation2], 4
      %s15 = int_to_ptr.vmem [resolvable:$true] %s14
      %17 = dma.hbm_to_vmem [thread:$0]  %s0, 256, %s15, [#allocation3]
    $region5: #{tpu_custom_call.1} parent=1 // pred_fallthru
      _
    // Predicated region
    $region6: #{tpu_custom_call.1} parent=1 // pred_check
      _
    $region7: #{tpu_custom_call.1} parent=1 // pred_check_branch
      %19 = sbr.rel (0) target = $region9
    $region8: #{tpu_custom_call.1} parent=1 // pred_region
      %20 = dma.done [#allocation3], 256
    $region9: #{tpu_custom_call.1} parent=1 // pred_fallthru
      _
    %v21 = vld [vmem:[#allocation2] sm:$0xff]
    %v22 = vld [vmem:[#allocation2 + $0x8] sm:$0xff]
    %23 = vst [vmem:[#allocation5] sm:$0xff] %v21
    %24 = vst [vmem:[#allocation5 + $0x8] sm:$0xff] %v22
    // Predicated region
    $region10: #{tpu_custom_call.1} parent=1 // pred_check
      _
    $region11: #{tpu_custom_call.1} parent=1 // pred_check_branch
      %26 = sbr.rel (0) target = $region13
    $region12: #{tpu_custom_call.1} parent=1 // pred_region
      %s28 = ssub.s32 256, 256
      %29 = vsyncadd [#allocation4], %s28
      %s31 = sshll.u32 [#allocation5], 4
      %s32 = int_to_ptr.vmem [resolvable:$true] %s31
      %34 = dma.vmem_to_hbm [thread:$0]  %s32, 256, %s1, [#allocation4]
    $region13: #{tpu_custom_call.1} parent=1 // pred_fallthru
      _
    // Predicated region
    $region14: #{tpu_custom_call.1} parent=1 // pred_check
      _
    $region15: #{tpu_custom_call.1} parent=1 // pred_check_branch
      %36 = sbr.rel (0) target = $region17
    $region16: #{tpu_custom_call.1} parent=1 // pred_region
      %37 = dma.done [#allocation4], 256
    $region17: #{tpu_custom_call.1} parent=1 // pred_fallthru
      _
    %38 = vsyncpa [#allocation3], 1
    %39 = vsyncpa [#allocation4], 1

</llo_original>
